<compile_context>
chip_gen: v7x
topology: tpu7x:2x2x1
jax: 0.10.0
libtpu: 0.0.40
codegen_flags: <defaults>
</compile_context>

<pallas_src>
import functools

import jax
import jax.numpy as jnp
from jax import lax
from jax.experimental import pallas as pl
from jax.experimental.pallas import tpu as pltpu


def _round_up(x, m):
    return -(-x // m) * m


def _ce_pixelwise_kernel(s_ref, t_ref, o_ref, acc_ref, *, hw, t_pix,
                         tiles_per_core, needs_mask):
    # s_ref, t_ref: (1, C, T_PIX) logits tile (channels = sublanes, pixels = lanes)
    # o_ref:        (1, 8, 128) per-core partial-sum output block
    # acc_ref:      (1, T_PIX) persistent per-core accumulator
    n = pl.program_id(1)
    j = pl.program_id(2)

    @pl.when((n == 0) & (j == 0))
    def _():
        acc_ref[...] = jnp.zeros_like(acc_ref)

    s = s_ref[0].astype(jnp.float32)  # (C, T_PIX)
    t = t_ref[0].astype(jnp.float32)  # (C, T_PIX)

    # Teacher softmax pieces (channel axis = sublanes, axis 0).
    t_max = jnp.max(t, axis=0, keepdims=True)                 # (1, T_PIX)
    t_exp = jnp.exp(t - t_max)                                # (C, T_PIX)
    inv_den = pl.reciprocal(jnp.sum(t_exp, axis=0, keepdims=True), approx=True)

    # Student log-softmax.
    s_max = jnp.max(s, axis=0, keepdims=True)                 # (1, T_PIX)
    s_shift = s - s_max                                       # (C, T_PIX)
    s_lse = jnp.log(jnp.sum(jnp.exp(s_shift), axis=0, keepdims=True))
    neg_log_sm = s_lse - s_shift                              # = -log_softmax(S)

    # Per-pixel CE: (1/den) * sum_c t_exp_c * (-log_softmax_S)_c  -> (1, T_PIX)
    contrib = jnp.sum(t_exp * neg_log_sm, axis=0, keepdims=True) * inv_den

    if needs_mask:
        tile_idx = pl.program_id(0) * tiles_per_core + j
        lane = lax.broadcasted_iota(jnp.int32, (1, t_pix), 1)
        contrib = jnp.where(tile_idx * t_pix + lane < hw, contrib, 0.0)

    acc_ref[...] += contrib

    @pl.when((n == pl.num_programs(1) - 1) & (j == pl.num_programs(2) - 1))
    def _():
        o_ref[...] = jnp.full(o_ref.shape, jnp.sum(acc_ref[...]), jnp.float32)


@jax.jit
def criterion_ce_pixelwise(preds_S, preds_T):
    """preds_S, preds_T: (N, C, W, H) logits. Returns scalar f32 loss."""
    assert preds_S.shape == preds_T.shape, \
        "the output dim of teacher and student differ"
    N, C, W, H = preds_S.shape
    HW = W * H

    # Free reshapes -- no HBM transpose of either tensor.
    s3 = preds_S.reshape(N, C, HW)
    t3 = preds_T.reshape(N, C, HW)

    # VMEM-budgeted pixel tile (multiple of 128 lanes). 2 inputs x 2 pipeline
    # buffers kept well under the default scoped-VMEM limit on v5e/v6e/v7x.
    c_sublanes = _round_up(max(C, 1), 8)
    itemsize = jnp.dtype(preds_S.dtype).itemsize
    budget = 6 * 1024 * 1024
    t_pix = budget // (4 * c_sublanes * itemsize)
    t_pix = max(128, (t_pix // 128) * 128)
    t_pix = min(t_pix, _round_up(HW, 128))

    num_tiles = -(-HW // t_pix)
    tpc = -(-num_tiles // 2)          # pixel tiles per TensorCore (v7x has 2 TCs)
    hw_pad = 2 * tpc * t_pix
    needs_mask = hw_pad != HW
    if needs_mask:
        pad = ((0, 0), (0, 0), (0, hw_pad - HW))
        s3 = jnp.pad(s3, pad)         # zero pads are masked out in the kernel
        t3 = jnp.pad(t3, pad)

    kernel = functools.partial(
        _ce_pixelwise_kernel, hw=HW, t_pix=t_pix, tiles_per_core=tpc,
        needs_mask=needs_mask)

    cost = pl.CostEstimate(
        flops=10 * N * C * HW,
        transcendentals=3 * N * C * HW,
        bytes_accessed=2 * N * C * HW * itemsize + 2 * 8 * 128 * 4,
    )

    partials = pl.pallas_call(
        kernel,
        out_shape=jax.ShapeDtypeStruct((2, 8, 128), jnp.float32),
        grid_spec=pltpu.PrefetchScalarGridSpec(
            num_scalar_prefetch=0,
            grid=(2, N, tpc),
            in_specs=[
                pl.BlockSpec((1, C, t_pix), lambda c, n, j: (n, 0, c * tpc + j)),
                pl.BlockSpec((1, C, t_pix), lambda c, n, j: (n, 0, c * tpc + j)),
            ],
            out_specs=pl.BlockSpec((1, 8, 128), lambda c, n, j: (c, 0, 0)),
            scratch_shapes=[pltpu.VMEM((1, t_pix), jnp.float32)],
        ),
        compiler_params=pltpu.CompilerParams(
            dimension_semantics=("parallel", "arbitrary", "arbitrary")),
        cost_estimate=cost,
    )(s3, t3)

    total = partials[:, 0, 0].sum()
    # per-sample: sum / (W*H); then averaged over N samples.
    return total / (W * H * N)


def _reference(preds_S, preds_T):
    # Pure-JAX reference reproducing the PyTorch loop exactly.
    N, C, W, H = preds_S.shape
    loss_pixel = 0.0
    for i in range(N):
        t = jnp.transpose(preds_T[i][None], (0, 2, 3, 1)).reshape(-1, C)
        s = jnp.transpose(preds_S[i][None], (0, 2, 3, 1)).reshape(-1, C)
        sm_t = jax.nn.softmax(t, axis=1)
        logsm_s = jax.nn.log_softmax(s, axis=1)
        loss = jnp.sum(-sm_t * logsm_s) / W / H
        loss_pixel = loss_pixel + loss
    return loss_pixel / N


if __name__ == "__main__":
    key = jax.random.PRNGKey(0)
    k1, k2 = jax.random.split(key)
    N, C, W, H = 2, 4, 16, 16
    preds_S = jax.random.normal(k1, (N, C, W, H), dtype=jnp.float32)
    preds_T = jax.random.normal(k2, (N, C, W, H), dtype=jnp.float32)

    loss = criterion_ce_pixelwise(preds_S, preds_T)
    jax.block_until_ready(loss)

    ref = _reference(preds_S, preds_T)
    # pl.reciprocal(approx=True) on the teacher-softmax denominator introduces
    # ~2^-12 relative error (irrelevant for a training loss), so compare at 1e-3.
    assert jnp.allclose(loss, ref, rtol=1e-3, atol=1e-5), (loss, ref)
    print("KERNEL_OK")
</pallas_src>

<mosaic_0001>
module attributes {stable_mosaic.version = 11 : i64} {
  func.func @_ce_pixelwise_kernel(%arg0: i32, %arg1: i32, %arg2: i32, %arg3: memref<1x4x256xf32, #tpu.memory_space<vmem>>, %arg4: memref<1x4x256xf32, #tpu.memory_space<vmem>>, %arg5: memref<1x8x128xf32, #tpu.memory_space<vmem>>, %arg6: memref<1x256xf32, #tpu.memory_space<vmem>>) attributes {dimension_semantics = [#tpu.dimension_semantics<parallel>, #tpu.dimension_semantics<arbitrary>, #tpu.dimension_semantics<arbitrary>], iteration_bounds = array<i64: 2, 2, 1>, scalar_prefetch = 0 : i64, scratch_operands = 1 : i64, tpu.core_type = #tpu.core_type<tc>, window_params = [{transform_indices = @transform_0, window_bounds = array<i64: 1, 4, 256>}, {transform_indices = @transform_1, window_bounds = array<i64: 1, 4, 256>}, {transform_indices = @transform_2, window_bounds = array<i64: 1, 8, 128>}]} {
    %c0_i32 = arith.constant 0 : i32
    %0 = arith.cmpi eq, %arg1, %c0_i32 : i32
    %c0_i32_0 = arith.constant 0 : i32
    %1 = arith.cmpi eq, %arg2, %c0_i32_0 : i32
    %2 = arith.andi %0, %1 : i1
    %3 = arith.extui %2 : i1 to i32
    %c0_i32_1 = arith.constant 0 : i32
    %4 = arith.cmpi ne, %3, %c0_i32_1 : i32
    scf.if %4 {
      %cst_20 = arith.constant 0.000000e+00 : f32
      %49 = vector.broadcast %cst_20 : f32 to vector<1x256xf32>
      %c0_21 = arith.constant 0 : index
      %c0_22 = arith.constant 0 : index
      %50 = vector.load %arg6[%c0_21, %c0_22] : memref<1x256xf32, #tpu.memory_space<vmem>>, vector<1x256xf32>
      tpu.vector_store %arg6[%c0_21, %c0_22], %49 {strides = array<i32>} : memref<1x256xf32, #tpu.memory_space<vmem>>, vector<1x256xf32>,
    } else {
    }
    %c0 = arith.constant 0 : index
    %c0_2 = arith.constant 0 : index
    %c0_3 = arith.constant 0 : index
    %5 = vector.load %arg3[%c0, %c0_2, %c0_3] : memref<1x4x256xf32, #tpu.memory_space<vmem>>, vector<1x4x256xf32>
    %6 = vector.shape_cast %5 : vector<1x4x256xf32> to vector<4x256xf32>
    %c0_4 = arith.constant 0 : index
    %c0_5 = arith.constant 0 : index
    %c0_6 = arith.constant 0 : index
    %7 = vector.load %arg4[%c0_4, %c0_5, %c0_6] : memref<1x4x256xf32, #tpu.memory_space<vmem>>, vector<1x4x256xf32>
    %8 = vector.shape_cast %7 : vector<1x4x256xf32> to vector<4x256xf32>
    %cst = arith.constant dense<0xFF800000> : vector<256xf32>
    %9 = vector.multi_reduction <maximumf>, %8, %cst [0] : vector<4x256xf32> to vector<256xf32>
    %10 = vector.shape_cast %9 : vector<256xf32> to vector<1x256xf32>
    %11 = vector.broadcast %10 : vector<1x256xf32> to vector<4x256xf32>
    %12 = arith.subf %8, %11 : vector<4x256xf32>
    %13 = math.exp %12 : vector<4x256xf32>
    %cst_7 = arith.constant dense<0.000000e+00> : vector<256xf32>
    %14 = vector.multi_reduction <add>, %13, %cst_7 [0] : vector<4x256xf32> to vector<256xf32>
    %15 = vector.shape_cast %14 : vector<256xf32> to vector<1x256xf32>
    %16 = tpu.reciprocal %15 {approx = true} : vector<1x256xf32> -> vector<1x256xf32>
    %cst_8 = arith.constant dense<0xFF800000> : vector<256xf32>
    %17 = vector.multi_reduction <maximumf>, %6, %cst_8 [0] : vector<4x256xf32> to vector<256xf32>
    %18 = vector.shape_cast %17 : vector<256xf32> to vector<1x256xf32>
    %19 = vector.broadcast %18 : vector<1x256xf32> to vector<4x256xf32>
    %20 = arith.subf %6, %19 : vector<4x256xf32>
    %21 = math.exp %20 : vector<4x256xf32>
    %cst_9 = arith.constant dense<0.000000e+00> : vector<256xf32>
    %22 = vector.multi_reduction <add>, %21, %cst_9 [0] : vector<4x256xf32> to vector<256xf32>
    %23 = vector.shape_cast %22 : vector<256xf32> to vector<1x256xf32>
    %24 = math.log %23 : vector<1x256xf32>
    %25 = vector.broadcast %24 : vector<1x256xf32> to vector<4x256xf32>
    %26 = arith.subf %25, %20 : vector<4x256xf32>
    %27 = arith.mulf %13, %26 : vector<4x256xf32>
    %cst_10 = arith.constant dense<0.000000e+00> : vector<256xf32>
    %28 = vector.multi_reduction <add>, %27, %cst_10 [0] : vector<4x256xf32> to vector<256xf32>
    %29 = vector.shape_cast %28 : vector<256xf32> to vector<1x256xf32>
    %30 = arith.mulf %29, %16 : vector<1x256xf32>
    %c1_i32 = arith.constant 1 : i32
    %31 = arith.muli %arg0, %c1_i32 : i32
    %32 = arith.addi %31, %arg2 : i32
    %33 = tpu.iota {dimensions = array<i32: 1>} : vector<1x256xi32>
    %c256_i32 = arith.constant 256 : i32
    %34 = arith.muli %32, %c256_i32 : i32
    %35 = vector.broadcast %34 : i32 to vector<1x256xi32>
    %36 = arith.addi %35, %33 : vector<1x256xi32>
    %c256_i32_11 = arith.constant 256 : i32
    %37 = vector.broadcast %c256_i32_11 : i32 to vector<1x256xi32>
    %38 = arith.cmpi slt, %36, %37 : vector<1x256xi32>
    %cst_12 = arith.constant 0.000000e+00 : f32
    %39 = vector.broadcast %cst_12 : f32 to vector<1x256xf32>
    %40 = arith.select %38, %30, %39 : vector<1x256xi1>, vector<1x256xf32>
    %c0_13 = arith.constant 0 : index
    %c0_14 = arith.constant 0 : index
    %41 = vector.load %arg6[%c0_13, %c0_14] : memref<1x256xf32, #tpu.memory_space<vmem>>, vector<1x256xf32>
    %42 = arith.addf %41, %40 : vector<1x256xf32>
    %c0_15 = arith.constant 0 : index
    %c0_16 = arith.constant 0 : index
    %43 = vector.load %arg6[%c0_15, %c0_16] : memref<1x256xf32, #tpu.memory_space<vmem>>, vector<1x256xf32>
    tpu.vector_store %arg6[%c0_15, %c0_16], %42 {strides = array<i32>} : memref<1x256xf32, #tpu.memory_space<vmem>>, vector<1x256xf32>,
    %c1_i32_17 = arith.constant 1 : i32
    %44 = arith.cmpi eq, %arg1, %c1_i32_17 : i32
    %c0_i32_18 = arith.constant 0 : i32
    %45 = arith.cmpi eq, %arg2, %c0_i32_18 : i32
    %46 = arith.andi %44, %45 : i1
    %47 = arith.extui %46 : i1 to i32
    %c0_i32_19 = arith.constant 0 : i32
    %48 = arith.cmpi ne, %47, %c0_i32_19 : i32
    scf.if %48 {
      %c0_20 = arith.constant 0 : index
      %c0_21 = arith.constant 0 : index
      %49 = vector.load %arg6[%c0_20, %c0_21] : memref<1x256xf32, #tpu.memory_space<vmem>>, vector<1x256xf32>
      %50 = vector.shape_cast %49 : vector<1x256xf32> to vector<1x1x256xf32>
      %cst_22 = arith.constant dense<0.000000e+00> : vector<1xf32>
      %51 = vector.multi_reduction <add>, %50, %cst_22 [1, 2] : vector<1x1x256xf32> to vector<1xf32>
      %52 = vector.shape_cast %51 : vector<1xf32> to vector<1x1x1xf32>
      %53 = vector.extract %52[0, 0, 0] : f32 from vector<1x1x1xf32>
      %54 = vector.broadcast %53 : f32 to vector<1x8x128xf32>
      %c0_23 = arith.constant 0 : index
      %c0_24 = arith.constant 0 : index
      %c0_25 = arith.constant 0 : index
      %55 = vector.load %arg5[%c0_23, %c0_24, %c0_25] : memref<1x8x128xf32, #tpu.memory_space<vmem>>, vector<1x8x128xf32>
      tpu.vector_store %arg5[%c0_23, %c0_24, %c0_25], %54 {strides = array<i32>} : memref<1x8x128xf32, #tpu.memory_space<vmem>>, vector<1x8x128xf32>,
    } else {
    }
    return
  }
  func.func @transform_0(%arg0: i32, %arg1: i32, %arg2: i32) -> (i32, i32, i32) {
    %c1_i32 = arith.constant 1 : i32
    %0 = arith.muli %arg0, %c1_i32 : i32
    %1 = arith.addi %0, %arg2 : i32
    %c0_i32 = arith.constant 0 : i32
    %c0_i32_0 = arith.constant 0 : i32
    return %arg1, %c0_i32, %1 : i32, i32, i32
  }
  func.func @transform_1(%arg0: i32, %arg1: i32, %arg2: i32) -> (i32, i32, i32) {
    %c1_i32 = arith.constant 1 : i32
    %0 = arith.muli %arg0, %c1_i32 : i32
    %1 = arith.addi %0, %arg2 : i32
    %c0_i32 = arith.constant 0 : i32
    %c0_i32_0 = arith.constant 0 : i32
    return %arg1, %c0_i32, %1 : i32, i32, i32
  }
  func.func @transform_2(%arg0: i32, %arg1: i32, %arg2: i32) -> (i32, i32, i32) {
    %c0_i32 = arith.constant 0 : i32
    %c0_i32_0 = arith.constant 0 : i32
    %c0_i32_1 = arith.constant 0 : i32
    return %arg0, %c0_i32, %c0_i32_0 : i32, i32, i32
  }
}

</mosaic_0001>

<llo_original>
// kernel: criterion_ce_pixelwise.1
$region0: #{criterion_ce_pixelwise.1}
  #allocation0 [shape = 'u32[]', space=smem, size = 0x4, offset = 0x4, fixed_abs, tag = 'smem constant byte address 0x4 - core index']
  #allocation1 [shape = 'u32[144,128]{1,0:T(1,128)}', space=vmem, size = 0x12000, scoped, tag = 'internal scratch']
  #allocation2 [shape = 'f32[1,256]{1,0:T(1,128)}', space=vmem, size = 0x400, scoped, tag = 'scratch operand']
  %s0 = inlined_call_operand.vmem [shape: f32[2,4,512], index: 0, kind: input, shape index: {}]
  %s1 = inlined_call_operand.vmem [shape: f32[2,4,512], index: 1, kind: input, shape index: {}]
  %s2 = inlined_call_operand.vmem [shape: f32[2,8,128], index: 2, kind: output, shape index: {}]
  %s3 = sld [smem:[#allocation0]]
  $region49: #{criterion_ce_pixelwise.1} parent=0
    _
  %s5 = ssub.s32 1, %s3
  %s6 = scalar_select 0, %s5, %s3
  loop: start=0, step=1, limit=6
  $region2: #{criterion_ce_pixelwise.1} parent=0 // loop_pre_header
    _
  $region3: #{criterion_ce_pixelwise.1} parent=0 // loop_header
    %s8 = sphi 0, %s12
    %p9 = scmp.ge.s32.totalorder %s8, 6
    %s15 = sphi 0, %s34
    %s16 = sphi 0, %s30
    %s17 = sphi 0, %s26
    %s18 = sphi 0, %s15
    %s19 = sphi 0, %s16
    %s20 = sphi 0, %s17
    %s21 = sphi 0, %s18
    %s22 = sphi 0, %s19
    %s23 = sphi 0, %s20
    %s41 = sphi 0, %s43
    %s44 = sphi 0, %s41
    %s45 = sphi 0, %s44
    %s61 = sphi 0, %s45
    %s71 = sphi 0, %s73
    %s74 = sphi 0, %s71
    %s75 = sphi 0, %s74
    %s91 = sphi 0, %s75
    %s97 = sphi 0, %s99
    %s100 = sphi 0, %s97
    %s101 = sphi 0, %s100
    %s117 = sphi 0, %s101
  $region4: #{criterion_ce_pixelwise.1} parent=0 // loop_header_branch
    %11 = sbr.rel (%p9) target = $region8
  $region5: #{criterion_ce_pixelwise.1} parent=0 // loop_body
    %s13 = ssub.s32 %s8, 1
    %s14 = ssub.s32 %s8, 2
    %s24 = sadd.s32 1, %s17
    %p25 = scmp.ge.s32.totalorder %s24, 1
    %s26 = scalar_select %p25, 0, %s24
    %s27 = sadd.s32 1, %s16
    %s28 = scalar_select %p25, %s27, %s16
    %p29 = scmp.ge.s32.totalorder %s28, 2
    %s30 = scalar_select %p29, 0, %s28
    %s31 = sadd.s32 1, %s15
    %s32 = scalar_select %p29, %s31, %s15
    %p33 = scmp.ge.s32.totalorder %s32, 2
    %s34 = scalar_select %p33, 0, %s32
    %s35 = sadd.s32 %s15, %s17
    %s36 = sadd.s32 %s34, %s26
    %s37 = ssub.s32 %s16, %s30
    %s38 = ssub.s32 %s35, %s36
    %s39 = sor.u32 %s37, %s38
    %p40 = scmp.eq.s32.totalorder %s39, 0
    %s42 = sadd.s32 %s41, 1
    %s43 = scalar_select %p40, %s41, %s42
    %p46 = pneg %p40
    %p47 = scmp.eq.s32.totalorder %s8, 3
    %p48 = por %p46, %p47
    %p49 = scmp.ne.s32.totalorder %s41, %s44
    %p50 = scmp.eq.s32.totalorder %s8, 0
    %p51 = por %p49, %p50
    %p52 = scmp.ne.s32.totalorder %s41, %s44
    %p53 = scmp.eq.s32.totalorder %s13, 3
    %p54 = por %p52, %p53
    %p55 = scmp.ne.s32.totalorder %s44, %s45
    %p56 = scmp.eq.s32.totalorder %s13, 0
    %p57 = por %p55, %p56
    %p58 = scmp.ne.s32.totalorder %s44, %s45
    %p59 = scmp.eq.s32.totalorder %s14, 3
    %p60 = por %p58, %p59
    %p62 = scmp.ne.s32.totalorder %s45, %s61
    %p63 = scmp.eq.s32.totalorder %s14, 0
    %p64 = por %p62, %p63
    %s65 = sadd.s32 %s15, %s17
    %s66 = sadd.s32 %s34, %s26
    %s67 = ssub.s32 %s16, %s30
    %s68 = ssub.s32 %s65, %s66
    %s69 = sor.u32 %s67, %s68
    %p70 = scmp.eq.s32.totalorder %s69, 0
    %s72 = sadd.s32 %s71, 1
    %s73 = scalar_select %p70, %s71, %s72
    %p76 = pneg %p70
    %p77 = scmp.eq.s32.totalorder %s8, 3
    %p78 = por %p76, %p77
    %p79 = scmp.ne.s32.totalorder %s71, %s74
    %p80 = scmp.eq.s32.totalorder %s8, 0
    %p81 = por %p79, %p80
    %p82 = scmp.ne.s32.totalorder %s71, %s74
    %p83 = scmp.eq.s32.totalorder %s13, 3
    %p84 = por %p82, %p83
    %p85 = scmp.ne.s32.totalorder %s74, %s75
    %p86 = scmp.eq.s32.totalorder %s13, 0
    %p87 = por %p85, %p86
    %p88 = scmp.ne.s32.totalorder %s74, %s75
    %p89 = scmp.eq.s32.totalorder %s14, 3
    %p90 = por %p88, %p89
    %p92 = scmp.ne.s32.totalorder %s75, %s91
    %p93 = scmp.eq.s32.totalorder %s14, 0
    %p94 = por %p92, %p93
    %s95 = ssub.s32 %s15, %s34
    %p96 = scmp.eq.s32.totalorder %s95, 0
    %s98 = sadd.s32 %s97, 1
    %s99 = scalar_select %p96, %s97, %s98
    %p102 = pneg %p96
    %p103 = scmp.eq.s32.totalorder %s8, 3
    %p104 = por %p102, %p103
    %p105 = scmp.ne.s32.totalorder %s97, %s100
    %p106 = scmp.eq.s32.totalorder %s8, 0
    %p107 = por %p105, %p106
    %p108 = scmp.ne.s32.totalorder %s97, %s100
    %p109 = scmp.eq.s32.totalorder %s13, 3
    %p110 = por %p108, %p109
    %p111 = scmp.ne.s32.totalorder %s100, %s101
    %p112 = scmp.eq.s32.totalorder %s13, 0
    %p113 = por %p111, %p112
    %p114 = scmp.ne.s32.totalorder %s100, %s101
    %p115 = scmp.eq.s32.totalorder %s14, 3
    %p116 = por %p114, %p115
    %p118 = scmp.ne.s32.totalorder %s101, %s117
    %p119 = scmp.eq.s32.totalorder %s14, 0
    %p120 = por %p118, %p119
    %p121 = scmp.le.s32.totalorder 1, %s8
    %p122 = scmp.lt.s32.totalorder %s8, 5
    %p123 = pnand %p121, %p122
    %p124 = pneg %p123
    // Predicated region
    $region9: #{criterion_ce_pixelwise.1} parent=5 // pred_check
      _
    $region10: #{criterion_ce_pixelwise.1} parent=5 // pred_check_branch
      %126 = sbr.rel (%p123) target = $region12
    $region11: #{criterion_ce_pixelwise.1} parent=5 // pred_region
      %s127 = ssub.s32 %s8, 1
    $region12: #{criterion_ce_pixelwise.1} parent=5 // pred_fallthru
      _
    %p128 = scmp.lt.s32.totalorder %s8, 4
    // Predicated region
    $region13: #{criterion_ce_pixelwise.1} parent=5 // pred_check
      %p129 = pneg %p128
    $region14: #{criterion_ce_pixelwise.1} parent=5 // pred_check_branch
      %131 = sbr.rel (%p129) target = $region16
    $region15: #{criterion_ce_pixelwise.1} parent=5 // pred_region
      // Predicated region
      $region17: #{criterion_ce_pixelwise.1} parent=15 // pred_check
        %p132 = pneg %p51
      $region18: #{criterion_ce_pixelwise.1} parent=15 // pred_check_branch
        %134 = sbr.rel (%p132) target = $region20
      $region19: #{criterion_ce_pixelwise.1} parent=15 // pred_region
        %s135 = sadd.s32 %s15, %s17
        %s136 = smul.u32 2, %s135
        %p137 = scmp.lt.s32.totalorder %s16, 1
        %s138 = scalar_select %p137, %s16, 1
        %p139 = scmp.lt.s32.totalorder %s136, 3
        %s140 = scalar_select %p139, %s136, 3
        %s141 = smul.addr %s138, 4
        %s142 = sadd.s32 %s140, %s141
        %s143 = smul.addr %s142, 4
        %s144 = scalar_lea.vmem %s0, %s143
        %s145 = sadd.s32 %s15, %s17
        %s146 = smul.u32 2, %s145
      $region20: #{criterion_ce_pixelwise.1} parent=15 // pred_fallthru
        _
      // Predicated region
      $region21: #{criterion_ce_pixelwise.1} parent=15 // pred_check
        %p147 = pneg %p81
      $region22: #{criterion_ce_pixelwise.1} parent=15 // pred_check_branch
        %149 = sbr.rel (%p147) target = $region24
      $region23: #{criterion_ce_pixelwise.1} parent=15 // pred_region
        %s150 = sadd.s32 %s15, %s17
        %s151 = smul.u32 2, %s150
        %p152 = scmp.lt.s32.totalorder %s16, 1
        %s153 = scalar_select %p152, %s16, 1
        %p154 = scmp.lt.s32.totalorder %s151, 3
        %s155 = scalar_select %p154, %s151, 3
        %s156 = smul.addr %s153, 4
        %s157 = sadd.s32 %s155, %s156
        %s158 = smul.addr %s157, 4
        %s159 = scalar_lea.vmem %s1, %s158
        %s160 = sadd.s32 %s15, %s17
        %s161 = smul.u32 2, %s160
      $region24: #{criterion_ce_pixelwise.1} parent=15 // pred_fallthru
        _
    $region16: #{criterion_ce_pixelwise.1} parent=5 // pred_fallthru
      _
    %p162 = scmp.le.s32.totalorder 1, %s8
    %p163 = scmp.lt.s32.totalorder %s8, 5
    %p164 = pnand %p162, %p163
    %p165 = pneg %p164
    // Predicated region
    $region25: #{criterion_ce_pixelwise.1} parent=5 // pred_check
      _
    $region26: #{criterion_ce_pixelwise.1} parent=5 // pred_check_branch
      %167 = sbr.rel (%p164) target = $region28
    $region27: #{criterion_ce_pixelwise.1} parent=5 // pred_region
      %s168 = ssub.s32 %s8, 1
      %s169 = sadd.s32 %s18, %s20
      %s170 = smul.u32 2, %s169
      %p171 = scmp.lt.s32.totalorder %s19, 1
      %s172 = scalar_select %p171, %s19, 1
      %p173 = scmp.lt.s32.totalorder %s170, 3
      %s174 = scalar_select %p173, %s170, 3
      %s175 = smul.addr %s172, 4
      %s176 = sadd.s32 %s174, %s175
      %s177 = smul.addr %s176, 4
      %s178 = scalar_lea.vmem %s0, %s177
      %p179 = pneg %p57
      %p180 = pneg %p54
      %s181 = sadd.s32 %s18, %s20
      %s182 = smul.u32 2, %s181
      %p183 = scmp.lt.s32.totalorder %s19, 1
      %s184 = scalar_select %p183, %s19, 1
      %p185 = scmp.lt.s32.totalorder %s182, 3
      %s186 = scalar_select %p185, %s182, 3
      %s187 = smul.addr %s184, 4
      %s188 = sadd.s32 %s186, %s187
      %s189 = smul.addr %s188, 4
      %s190 = scalar_lea.vmem %s1, %s189
      %p191 = pneg %p87
      %p192 = pneg %p84
      %p193 = pneg %p113
      %p194 = pneg %p110
      %p195 = scmp.lt.s32.totalorder %s18, 1
      %s196 = scalar_select %p195, %s18, 1
      %s197 = smul.addr %s196, 8
      %s198 = scalar_lea.vmem %s2, %s197
      %s199 = sadd.s32 %s18, %s20
      %s200 = smul.u32 2, %s199
      %p201 = scmp.lt.s32.totalorder %s19, 1
      %s202 = scalar_select %p201, %s19, 1
      %p203 = scmp.lt.s32.totalorder %s200, 3
      %s204 = scalar_select %p203, %s200, 3
      %s205 = smul.addr %s202, 4
      %s206 = sadd.s32 %s204, %s205
      %s207 = smul.addr %s206, 4
      %s208 = scalar_lea.vmem %s0, %s207
      %s209 = sadd.s32 %s18, %s20
      %s210 = smul.u32 2, %s209
      %s211 = sadd.s32 %s18, %s20
      %s212 = smul.u32 2, %s211
      %p213 = scmp.lt.s32.totalorder %s19, 1
      %s214 = scalar_select %p213, %s19, 1
      %p215 = scmp.lt.s32.totalorder %s212, 3
      %s216 = scalar_select %p215, %s212, 3
      %s217 = smul.addr %s214, 4
      %s218 = sadd.s32 %s216, %s217
      %s219 = smul.addr %s218, 4
      %s220 = scalar_lea.vmem %s1, %s219
      %s221 = sadd.s32 %s18, %s20
      %s222 = smul.u32 2, %s221
      %p223 = scmp.lt.s32.totalorder %s18, 1
      %s224 = scalar_select %p223, %s18, 1
      %s225 = smul.addr %s224, 8
      %s226 = scalar_lea.vmem %s2, %s225
      %p227 = scmp.eq.s32.totalorder %s19, 0
      %p228 = scmp.eq.s32.totalorder %s20, 0
      %p229 = pnand %p227, %p228
      %p230 = pneg %p229
      // Predicated region
      $region29: #{criterion_ce_pixelwise.1} parent=27 // pred_check
        _
      $region30: #{criterion_ce_pixelwise.1} parent=27 // pred_check_branch
        %232 = sbr.rel (%p229) target = $region32
      $region31: #{criterion_ce_pixelwise.1} parent=27 // pred_region
        %v233 = vlaneseq
        %vm234 = vcmp.ge.s32.totalorder %v233, 0
        %vm235 = vcmp.lt.s32.totalorder %v233, 256
        %vm236 = vmand %vm234, %vm235
        %237 = vst.msk [vmem:[#allocation2] sm:$0x3] %vm236, 0.0
      $region32: #{criterion_ce_pixelwise.1} parent=27 // pred_fallthru
        _
      %v238 = vld [vmem:[%s208] sm:$0xff]
      %v239 = vld [vmem:[%s220] sm:$0xff]
      %v241 = vcombine.high %v239, %v239
      %vm243 = vcmask 1043456
      %v244 = vsel %vm243, %v239, -inf
      %v245 = vrot.slane %v244, 4
      %v246 = vmax.f32 %v244, %v245
      %v247 = vrot.slane %v246, 2
      %v248 = vmax.f32 %v246, %v247
      %v249 = vrot.slane %v248, 1
      %v250 = vmax.f32 %v248, %v249
      %v251 = vsel %vm243, %v241, -inf
      %v252 = vrot.slane %v251, 4
      %v253 = vmax.f32 %v251, %v252
      %v254 = vrot.slane %v253, 2
      %v255 = vmax.f32 %v253, %v254
      %v256 = vrot.slane %v255, 1
      %v257 = vmax.f32 %v255, %v256
      %v260 = vcombine.low %v250, %v257
      %v262 = vsub.f32 %v239, %v260
      %v263 = vmul.f32 %v262, 1.442695
      %v264 = vpow.pop %v263
      %v266 = vcombine.high %v264, %v264
      %v268 = vsel %vm243, %v264, 0.0
      %v269 = vrot.slane %v268, 4
      %v270 = vadd.f32 %v268, %v269
      %v271 = vrot.slane %v270, 2
      %v272 = vadd.f32 %v270, %v271
      %v273 = vrot.slane %v272, 1
      %v274 = vadd.f32 %v272, %v273
      %v275 = vsel %vm243, %v266, 0.0
      %v276 = vrot.slane %v275, 4
      %v277 = vadd.f32 %v275, %v276
      %v278 = vrot.slane %v277, 2
      %v279 = vadd.f32 %v277, %v278
      %v280 = vrot.slane %v279, 1
      %v281 = vadd.f32 %v279, %v280
      %v282 = vrcp.pop %v274
      %v283 = vrcp.pop %v281
      %v285 = vcombine.high %v238, %v238
      %v287 = vsel %vm243, %v238, -inf
      %v288 = vrot.slane %v287, 4
      %v289 = vmax.f32 %v287, %v288
      %v290 = vrot.slane %v289, 2
      %v291 = vmax.f32 %v289, %v290
      %v292 = vrot.slane %v291, 1
      %v293 = vmax.f32 %v291, %v292
      %v294 = vsel %vm243, %v285, -inf
      %v295 = vrot.slane %v294, 4
      %v296 = vmax.f32 %v294, %v295
      %v297 = vrot.slane %v296, 2
      %v298 = vmax.f32 %v296, %v297
      %v299 = vrot.slane %v298, 1
      %v300 = vmax.f32 %v298, %v299
      %v303 = vcombine.low %v293, %v300
      %v305 = vsub.f32 %v238, %v303
      %v306 = vmul.f32 %v305, 1.442695
      %v307 = vpow.pop %v306
      %v309 = vcombine.high %v307, %v307
      %v311 = vsel %vm243, %v307, 0.0
      %v312 = vrot.slane %v311, 4
      %v313 = vadd.f32 %v311, %v312
      %v314 = vrot.slane %v313, 2
      %v315 = vadd.f32 %v313, %v314
      %v316 = vrot.slane %v315, 1
      %v317 = vadd.f32 %v315, %v316
      %v318 = vsel %vm243, %v309, 0.0
      %v319 = vrot.slane %v318, 4
      %v320 = vadd.f32 %v318, %v319
      %v321 = vrot.slane %v320, 2
      %v322 = vadd.f32 %v320, %v321
      %v323 = vrot.slane %v322, 1
      %v324 = vadd.f32 %v322, %v323
      %v325 = vlog2.pop %v317
      %v326 = vmul.f32 %v325, 0.6931472
      %v327 = vlog2.pop %v324
      %v328 = vmul.f32 %v327, 0.6931472
      %v330 = vcombine.high %v305, %v305
      %v332 = vsub.f32 %v326, %v305
      %v333 = vsub.f32 %v328, %v330
      %v336 = vcombine.low %v332, %v333
      %v338 = vmul.f32 %v264, %v336
      %v340 = vcombine.high %v338, %v338
      %v342 = vsel %vm243, %v338, 0.0
      %v343 = vrot.slane %v342, 4
      %v344 = vadd.f32 %v342, %v343
      %v345 = vrot.slane %v344, 2
      %v346 = vadd.f32 %v344, %v345
      %v347 = vrot.slane %v346, 1
      %v348 = vadd.f32 %v346, %v347
      %v349 = vsel %vm243, %v340, 0.0
      %v350 = vrot.slane %v349, 4
      %v351 = vadd.f32 %v349, %v350
      %v352 = vrot.slane %v351, 2
      %v353 = vadd.f32 %v351, %v352
      %v354 = vrot.slane %v353, 1
      %v355 = vadd.f32 %v353, %v354
      %v356 = vmul.f32 %v348, %v282
      %v357 = vmul.f32 %v355, %v283
      %s358 = sadd.s32 %s18, %s20
      %v359 = vlaneseq
      %v360 = vand.u32 %v359, 127
      %v361 = vadd.s32 %v360, 128
      %s362 = smul.u32 %s358, 256
      %v363 = vstv %s362
      %v364 = vadd.s32 %v363, %v360
      %v365 = vadd.s32 %v363, %v361
      %vm366 = vcmp.lt.s32.totalorder %v364, 256
      %vm367 = vcmp.lt.s32.totalorder %v365, 256
      %v368 = vsel %vm366, %v356, 0.0
      %v369 = vsel %vm367, %v357, 0.0
      %v370 = vld [vmem:[#allocation2] sm:$0x3]
      %v373 = vcombine.low %v368, %v369
      %v375 = vunpack.c.l.s4 1966171168
      %v376 = vunpack.c.0.s8 %v375
      %v377 = vlaneseq
      %v378 = vshrl.u32 %v377, 7
      %v379 = vsub.s32 %v376, %v378
      %v380 = vrot.slane %v373, %v379
      %v382 = vunpack.c.l.s4 1966171168
      %v383 = vunpack.c.0.s8 %v382
      %v384 = vlaneseq
      %v385 = vshrl.u32 %v384, 7
      %v386 = vsub.s32 %v383, %v385
      %v387 = vrot.slane %v380, %v386
      %v389 = vadd.f32 %v370, %v387
      %v390 = vlaneseq
      %vm391 = vcmp.ge.s32.totalorder %v390, 0
      %vm392 = vcmp.lt.s32.totalorder %v390, 256
      %vm393 = vmand %vm391, %vm392
      %394 = vst.msk [vmem:[#allocation2] sm:$0x3] %vm393, %v389
      %p395 = scmp.eq.s32.totalorder %s19, 1
      %p396 = pnand %p395, %p228
      %p397 = pneg %p396
      // Predicated region
      $region33: #{criterion_ce_pixelwise.1} parent=27 // pred_check
        _
      $region34: #{criterion_ce_pixelwise.1} parent=27 // pred_check_branch
        %399 = sbr.rel (%p396) target = $region36
      $region35: #{criterion_ce_pixelwise.1} parent=27 // pred_region
        %v400 = vld [vmem:[#allocation2] sm:$0x3]
        %v402 = vlaneseq
        %v403 = vshrl.u32 %v402, 7
        %v404 = vsub.s32 0, %v403
        %v405 = vrot.slane %v400, %v404
        %v406 = vlaneseq
        %v407 = vshrl.u32 %v406, 7
        %v408 = vsub.s32 1, %v407
        %v409 = vrot.slane %v400, %v408
        %vm412 = vcmask 1040384
        %v413 = vsel %vm412, %v405, 0.0
        %v414 = vsel %vm412, %v409, 0.0
        %v415 = vadd.f32 %v413, %v414
        %416 = vadd.xlane.f32.xlu0 %v415
        %v417 = vpop.xlane.xlu0 %416
        %v418 = vrot.slane %v417, 4
        %v419 = vadd.f32 %v417, %v418
        %v420 = vrot.slane %v419, 2
        %v421 = vadd.f32 %v419, %v420
        %v422 = vrot.slane %v421, 1
        %v423 = vadd.f32 %v421, %v422
        %s424 = vtos %v423
        %v425 = vstv %s424
        %426 = vst [vmem:[%s226] sm:$0xff] %v425
      $region36: #{criterion_ce_pixelwise.1} parent=27 // pred_fallthru
        _
      %p427 = scmp.lt.s32.totalorder %s18, 1
      %s428 = scalar_select %p427, %s18, 1
      %s429 = smul.addr %s428, 8
      %s430 = scalar_lea.vmem %s2, %s429
      // Predicated region
      $region37: #{criterion_ce_pixelwise.1} parent=27 // pred_check
        %p431 = pneg %p110
      $region38: #{criterion_ce_pixelwise.1} parent=27 // pred_check_branch
        %433 = sbr.rel (%p431) target = $region40
      $region39: #{criterion_ce_pixelwise.1} parent=27 // pred_region
        _
      $region40: #{criterion_ce_pixelwise.1} parent=27 // pred_fallthru
        _
    $region28: #{criterion_ce_pixelwise.1} parent=5 // pred_fallthru
      _
    %p434 = scmp.le.s32.totalorder 2, %s8
    // Predicated region
    $region41: #{criterion_ce_pixelwise.1} parent=5 // pred_check
      %p435 = pneg %p434
    $region42: #{criterion_ce_pixelwise.1} parent=5 // pred_check_branch
      %437 = sbr.rel (%p435) target = $region44
    $region43: #{criterion_ce_pixelwise.1} parent=5 // pred_region
      %s438 = ssub.s32 %s8, 2
      // Predicated region
      $region45: #{criterion_ce_pixelwise.1} parent=43 // pred_check
        %p439 = pneg %p116
      $region46: #{criterion_ce_pixelwise.1} parent=43 // pred_check_branch
        %441 = sbr.rel (%p439) target = $region48
      $region47: #{criterion_ce_pixelwise.1} parent=43 // pred_region
        %p442 = scmp.lt.s32.totalorder %s21, 1
        %s443 = scalar_select %p442, %s21, 1
        %s444 = smul.addr %s443, 8
        %s445 = scalar_lea.vmem %s2, %s444
      $region48: #{criterion_ce_pixelwise.1} parent=43 // pred_fallthru
        _
    $region44: #{criterion_ce_pixelwise.1} parent=5 // pred_fallthru
      _
  $region6: #{criterion_ce_pixelwise.1} parent=0 // loop_footer
    %s12 = sadd.s32 1, %s8
  $region7: #{criterion_ce_pixelwise.1} parent=0 // loop_footer_branch
    %7 = sbr.rel target = $region3
  $region8: #{criterion_ce_pixelwise.1} parent=0 // loop_exit
    _

</llo_original>
